<compile_context>
chip_gen: v7x
topology: tpu7x:2x2x1
jax: 0.10.0
libtpu: 0.0.40
codegen_flags: <defaults>
</compile_context>

<pallas_src>
import math
import functools

import jax
import jax.numpy as jnp
import numpy as np
from jax import lax
from jax.experimental import pallas as pl
from jax.experimental.pallas import tpu as pltpu

# ---------------- model config (small, synthetic) ----------------
HIDDEN = 32          # text_config.hidden_size
N_HEADS = 4          # perceiver_config.resampler_n_heads
HEAD_DIM = 8         # perceiver_config.resampler_head_dim
N_KV_HEADS = 2       # perceiver_config.num_key_value_heads
N_REP = N_HEADS // N_KV_HEADS
N_LATENTS = 8        # perceiver_config.resampler_n_latents
INTERMEDIATE = HIDDEN * 4
RMS_EPS = 1e-6
BATCH = 2
SEQ = 16             # context length

KV = N_HEADS * HEAD_DIM          # per-token q / (expanded) k / v width


def _rmsnorm(x_f32, w_row, eps):
    # x_f32: (T, D) float32, w_row: (1, D)
    var = jnp.mean(x_f32 * x_f32, axis=-1, keepdims=True)
    return w_row * (x_f32 * jax.lax.rsqrt(var + eps))


def perceiver_layer_kernel(
    lat_ref, ctx_ref, mask_ref,
    ln_lat_w_ref, ln_ctx_w_ref,
    wq_ref, wkv_ref, wo_ref,
    post_ln_w_ref, wgu_ref, wd_ref,
    out_ref,
    hid_ref,
    *, bb, n_lat, n_ctx,
):
    f32, bf16 = jnp.float32, jnp.bfloat16
    L, S = n_lat, n_ctx
    T = S + L

    lat_in = lat_ref[...].astype(f32)          # (bb*L, D)
    ctx_in = ctx_ref[...].astype(f32)          # (bb*S, D)

    # ---- input RMSNorms in f32 (matches the torch module) ----
    lat_n = _rmsnorm(lat_in, ln_lat_w_ref[...], RMS_EPS)
    ctx_n = _rmsnorm(ctx_in, ln_ctx_w_ref[...], RMS_EPS)
    lat16 = lat_n.astype(bf16)
    ctx16 = ctx_n.astype(bf16)

    # hidden = [context; latents] per batch element, written straight into a
    # VMEM scratch (no jnp.concatenate / extra relayout). Offsets are
    # multiples of 8 sublanes (S=16, T=24).
    for b in range(bb):
        hid_ref[b * T:b * T + S, :] = ctx16[b * S:(b + 1) * S, :]
        hid_ref[b * T + S:(b + 1) * T, :] = lat16[b * L:(b + 1) * L, :]

    # ---- fused projections (bf16 MXU operands, f32 accumulation) ----
    # NOTE: 1/sqrt(head_dim) is folded into wq at trace time.
    q16 = jnp.dot(lat16, wq_ref[...],
                  preferred_element_type=f32).astype(bf16)           # (bb*L, KV)
    kv16 = jnp.dot(hid_ref[...], wkv_ref[...],
                   preferred_element_type=f32).astype(bf16)          # (bb*T, 2*KV)

    mask2 = mask_ref[...]       # (H*T, 2*KV) 0/1 bf16 [head_mask | head_mask]
    head_mask = mask2[:, :KV]   # (H*T, KV)

    # ---- attention: all heads in one pass (small static loop over the batch
    #      elements that share this grid step; heads are NOT looped). ----
    # TODO(synk): attention_mask is optional in the reference forward; only the
    # mask=None path is implemented here (dropout is eval-mode / identity).
    attn_rows = []
    for b in range(bb):
        qb = q16[b * L:(b + 1) * L, :]                        # (L, KV)
        kvb = kv16[b * T:(b + 1) * T, :]                      # (T, 2*KV)
        kvt = jnp.concatenate([kvb] * N_HEADS, axis=0)        # (H*T, 2*KV)
        kvm = kvt * mask2                                     # [k_exp | v_exp], block-diag
        # scores for every (head, key) pair in a single MXU matmul: (L, H*T)
        s = lax.dot_general(qb, kvm[:, :KV], (((1,), (1,)), ((), ())),
                            preferred_element_type=f32)
        # one max/exp pass over the stacked scores; the per-row max is shared
        # by every head of that row, which leaves the per-head softmax
        # unchanged after normalization.
        m = jnp.max(s, axis=-1, keepdims=True)
        e = jnp.exp(s - m).astype(bf16)                       # (L, H*T)
        o_un = jnp.dot(e, kvm[:, KV:], preferred_element_type=f32)   # (L, KV) unnormalized
        denom = jnp.dot(e, head_mask, preferred_element_type=f32)    # (L, KV) per-head sums
        attn_rows.append(o_un * pl.reciprocal(denom, approx=True))
    attn = attn_rows[0] if bb == 1 else jnp.concatenate(attn_rows, axis=0)  # (bb*L, KV)

    attn = jnp.dot(attn.astype(bf16), wo_ref[...],
                   preferred_element_type=f32)                # (bb*L, D)

    # ---- residual + post-attention RMSNorm + SwiGLU MLP + residual ----
    lat1 = lat_in + attn
    lat1_n = _rmsnorm(lat1, post_ln_w_ref[...], RMS_EPS)

    gu = jnp.dot(lat1_n.astype(bf16), wgu_ref[...],
                 preferred_element_type=f32)                  # (bb*L, 2*I)
    gate = gu[:, :INTERMEDIATE]
    up = gu[:, INTERMEDIATE:]
    act = gate * jax.nn.sigmoid(gate)                         # SiLU in f32
    mlp = jnp.dot((act * up).astype(bf16), wd_ref[...],
                  preferred_element_type=f32)                 # (bb*L, D)

    out_ref[...] = (lat1 + mlp).astype(out_ref.dtype)


def _default_batch_block(batch):
    """Fold the whole batch into one grid step on single-TC chips (v5e/v6e);
    keep a 2-wide 'parallel' grid axis on v7x so both TensorCores are used."""
    try:
        kind = jax.devices()[0].device_kind.lower()
    except Exception:
        kind = ""
    if ("v7" in kind or "7x" in kind) and batch % 2 == 0:
        return batch // 2
    return batch


def perceiver_layer(latents, context, params, batch_block=None):
    B, L, D = latents.shape
    _, S, _ = context.shape
    T = S + L

    if batch_block is None:
        batch_block = _default_batch_block(B)
    assert B % batch_block == 0
    steps = B // batch_block

    # ---- trace-time weight prep (runs in XLA, outside the kernel) ----
    # Fold repeat_kv into the k/v weights (head h uses kv head h // n_rep),
    # fold 1/sqrt(head_dim) into the q weight, fuse k|v and gate|up, and cast
    # every MXU operand to bf16.
    wk_rep = jnp.repeat(params["wk"].reshape(D, N_KV_HEADS, HEAD_DIM),
                        N_REP, axis=1).reshape(D, KV)
    wv_rep = jnp.repeat(params["wv"].reshape(D, N_KV_HEADS, HEAD_DIM),
                        N_REP, axis=1).reshape(D, KV)
    wkv = jnp.concatenate([wk_rep, wv_rep], axis=1).astype(jnp.bfloat16)       # (D, 2*KV)
    wq = (params["wq"] * (1.0 / math.sqrt(HEAD_DIM))).astype(jnp.bfloat16)     # scale folded in
    wo = params["wo"].astype(jnp.bfloat16)
    wgu = jnp.concatenate([params["wg"], params["wu"]],
                          axis=1).astype(jnp.bfloat16)                          # (D, 2*I)
    wd = params["wd"].astype(jnp.bfloat16)

    # Block-diagonal head mask: row h*T+t belongs to head h, column c to head
    # c//hd. Fused as [mask | mask] so keys and values are masked in one multiply.
    row_h = np.arange(N_HEADS * T)[:, None] // T
    col_h = np.arange(KV)[None, :] // HEAD_DIM
    head_mask = (row_h == col_h).astype(np.float32)
    mask2 = jnp.asarray(np.concatenate([head_mask, head_mask], axis=1),
                        dtype=jnp.bfloat16)                                     # (H*T, 2*KV)

    # Fold (B, L) / (B, S) into the sublane axis of every matmul.
    lat2d = latents.reshape(B * L, D)
    ctx2d = context.reshape(B * S, D)

    def full(shape):
        zeros = (0,) * len(shape)
        return pl.BlockSpec(shape, lambda i: zeros)

    kernel = functools.partial(perceiver_layer_kernel,
                               bb=batch_block, n_lat=L, n_ctx=S)

    out2d = pl.pallas_call(
        kernel,
        out_shape=jax.ShapeDtypeStruct((B * L, D), latents.dtype),
        grid=(steps,),
        in_specs=[
            pl.BlockSpec((batch_block * L, D), lambda i: (i, 0)),   # latents rows
            pl.BlockSpec((batch_block * S, D), lambda i: (i, 0)),   # context rows
            full((N_HEADS * T, 2 * KV)),    # fused [mask | mask] head-block mask
            full((1, D)), full((1, D)),     # input_latents_norm / input_context_norm
            full((D, KV)),                  # q_proj (scale folded in)
            full((D, 2 * KV)),              # fused k|v (repeat_kv folded in)
            full((KV, D)),                  # o_proj
            full((1, D)),                   # post_attention_layernorm
            full((D, 2 * INTERMEDIATE)),    # fused gate|up
            full((INTERMEDIATE, D)),        # down_proj
        ],
        out_specs=pl.BlockSpec((batch_block * L, D), lambda i: (i, 0)),
        scratch_shapes=[pltpu.VMEM((batch_block * T, D), jnp.bfloat16)],
        compiler_params=pltpu.CompilerParams(
            dimension_semantics=("parallel",)),
    )(
        lat2d, ctx2d, mask2,
        params["ln_lat_w"], params["ln_ctx_w"],
        wq, wkv, wo,
        params["post_ln_w"], wgu, wd,
    )
    # TODO(synk): at production sizes (HIDDEN~4096, INTERMEDIATE~14336) the
    # full-weight BlockSpecs must become K/N-tiled with double buffering
    # (especially for v7x's 64 MiB VMEM); at this toy config they fit easily.
    return out2d.reshape(B, L, D)


# ---------------- pure-JAX reference (mirrors the torch code, f32) ----------------
def _ref_rmsnorm(x, w):
    xf = x.astype(jnp.float32)
    var = jnp.mean(xf * xf, axis=-1, keepdims=True)
    return (w * (xf * jax.lax.rsqrt(var + RMS_EPS))).astype(x.dtype)


def reference_layer(latents, context, p):
    residual = latents
    lat = _ref_rmsnorm(latents, p["ln_lat_w"][0])
    ctx = _ref_rmsnorm(context, p["ln_ctx_w"][0])
    hidden = jnp.concatenate([ctx, lat], axis=1)                   # (B, S+L, D)
    B, L, D = lat.shape
    T = hidden.shape[1]

    q = (lat @ p["wq"]).reshape(B, L, N_HEADS, HEAD_DIM).transpose(0, 2, 1, 3)
    k = (hidden @ p["wk"]).reshape(B, T, N_KV_HEADS, HEAD_DIM).transpose(0, 2, 1, 3)
    v = (hidden @ p["wv"]).reshape(B, T, N_KV_HEADS, HEAD_DIM).transpose(0, 2, 1, 3)
    k = jnp.repeat(k, N_REP, axis=1)
    v = jnp.repeat(v, N_REP, axis=1)
    scores = jnp.einsum("bhld,bhtd->bhlt", q, k) / math.sqrt(HEAD_DIM)
    w = jax.nn.softmax(scores.astype(jnp.float32), axis=-1)
    o = jnp.einsum("bhlt,bhtd->bhld", w, v)
    o = o.transpose(0, 2, 1, 3).reshape(B, L, N_HEADS * HEAD_DIM) @ p["wo"]

    lat1 = residual + o
    lat1_n = _ref_rmsnorm(lat1, p["post_ln_w"][0])
    gate = lat1_n @ p["wg"]
    up = lat1_n @ p["wu"]
    mlp = (jax.nn.silu(gate) * up) @ p["wd"]
    return lat1 + mlp


def make_params(key):
    ks = jax.random.split(key, 8)
    s = 0.05
    return {
        "ln_lat_w": jnp.ones((1, HIDDEN), jnp.float32),
        "ln_ctx_w": jnp.ones((1, HIDDEN), jnp.float32),
        "post_ln_w": jnp.ones((1, HIDDEN), jnp.float32),
        "wq": s * jax.random.normal(ks[0], (HIDDEN, N_HEADS * HEAD_DIM), jnp.float32),
        "wk": s * jax.random.normal(ks[1], (HIDDEN, N_KV_HEADS * HEAD_DIM), jnp.float32),
        "wv": s * jax.random.normal(ks[2], (HIDDEN, N_KV_HEADS * HEAD_DIM), jnp.float32),
        "wo": s * jax.random.normal(ks[3], (N_HEADS * HEAD_DIM, HIDDEN), jnp.float32),
        "wg": s * jax.random.normal(ks[4], (HIDDEN, INTERMEDIATE), jnp.float32),
        "wu": s * jax.random.normal(ks[5], (HIDDEN, INTERMEDIATE), jnp.float32),
        "wd": s * jax.random.normal(ks[6], (INTERMEDIATE, HIDDEN), jnp.float32),
    }


if __name__ == "__main__":
    key = jax.random.PRNGKey(0)
    k_lat, k_ctx, k_par = jax.random.split(key, 3)
    latents = jax.random.normal(k_lat, (BATCH, N_LATENTS, HIDDEN), jnp.float32)
    context = jax.random.normal(k_ctx, (BATCH, SEQ, HIDDEN), jnp.float32)
    params = make_params(k_par)

    out = perceiver_layer(latents, context, params)
    out = jax.block_until_ready(out)

    ref = jax.block_until_ready(reference_layer(latents, context, params))
    # bf16 MXU operands + approx reciprocal -> looser tolerance than pure f32.
    np.testing.assert_allclose(np.asarray(out), np.asarray(ref), rtol=2e-2, atol=2e-2)

    print("KERNEL_OK")
</pallas_src>

<mosaic_0001>
module attributes {stable_mosaic.version = 11 : i64} {
  func.func @perceiver_layer_kernel(%arg0: i32, %arg1: memref<16x32xf32, #tpu.memory_space<vmem>>, %arg2: memref<32x32xf32, #tpu.memory_space<vmem>>, %arg3: memref<96x64xbf16, #tpu.memory_space<vmem>>, %arg4: memref<1x32xf32, #tpu.memory_space<vmem>>, %arg5: memref<1x32xf32, #tpu.memory_space<vmem>>, %arg6: memref<32x32xbf16, #tpu.memory_space<vmem>>, %arg7: memref<32x64xbf16, #tpu.memory_space<vmem>>, %arg8: memref<32x32xbf16, #tpu.memory_space<vmem>>, %arg9: memref<1x32xf32, #tpu.memory_space<vmem>>, %arg10: memref<32x256xbf16, #tpu.memory_space<vmem>>, %arg11: memref<128x32xbf16, #tpu.memory_space<vmem>>, %arg12: memref<16x32xf32, #tpu.memory_space<vmem>>, %arg13: memref<48x32xbf16, #tpu.memory_space<vmem>>) attributes {dimension_semantics = [#tpu.dimension_semantics<parallel>], iteration_bounds = array<i64: 1>, scalar_prefetch = 0 : i64, scratch_operands = 1 : i64, tpu.core_type = #tpu.core_type<tc>, window_params = [{transform_indices = @transform_0, window_bounds = array<i64: 16, 32>}, {transform_indices = @transform_1, window_bounds = array<i64: 32, 32>}, {pipeline_mode = #tpu.pipeline_mode<synchronous>, transform_indices = @transform_2, window_bounds = array<i64: 96, 64>}, {pipeline_mode = #tpu.pipeline_mode<synchronous>, transform_indices = @transform_3, window_bounds = array<i64: 1, 32>}, {pipeline_mode = #tpu.pipeline_mode<synchronous>, transform_indices = @transform_4, window_bounds = array<i64: 1, 32>}, {pipeline_mode = #tpu.pipeline_mode<synchronous>, transform_indices = @transform_5, window_bounds = array<i64: 32, 32>}, {pipeline_mode = #tpu.pipeline_mode<synchronous>, transform_indices = @transform_6, window_bounds = array<i64: 32, 64>}, {pipeline_mode = #tpu.pipeline_mode<synchronous>, transform_indices = @transform_7, window_bounds = array<i64: 32, 32>}, {pipeline_mode = #tpu.pipeline_mode<synchronous>, transform_indices = @transform_8, window_bounds = array<i64: 1, 32>}, {pipeline_mode = #tpu.pipeline_mode<synchronous>, transform_indices = @transform_9, window_bounds = array<i64: 32, 256>}, {pipeline_mode = #tpu.pipeline_mode<synchronous>, transform_indices = @transform_10, window_bounds = array<i64: 128, 32>}, {transform_indices = @transform_11, window_bounds = array<i64: 16, 32>}]} {
    %c0 = arith.constant 0 : index
    %c0_0 = arith.constant 0 : index
    %0 = vector.load %arg1[%c0, %c0_0] : memref<16x32xf32, #tpu.memory_space<vmem>>, vector<16x32xf32>
    %c0_1 = arith.constant 0 : index
    %c0_2 = arith.constant 0 : index
    %1 = vector.load %arg2[%c0_1, %c0_2] : memref<32x32xf32, #tpu.memory_space<vmem>>, vector<32x32xf32>
    %c0_3 = arith.constant 0 : index
    %c0_4 = arith.constant 0 : index
    %2 = vector.load %arg4[%c0_3, %c0_4] : memref<1x32xf32, #tpu.memory_space<vmem>>, vector<1x32xf32>
    %3 = arith.mulf %0, %0 : vector<16x32xf32>
    %cst = arith.constant dense<0.000000e+00> : vector<16xf32>
    %4 = vector.multi_reduction <add>, %3, %cst [1] : vector<16x32xf32> to vector<16xf32>
    %5 = vector.shape_cast %4 : vector<16xf32> to vector<16x1xf32>
    %cst_5 = arith.constant 3.200000e+01 : f32
    %6 = vector.broadcast %cst_5 : f32 to vector<16x1xf32>
    %7 = arith.divf %5, %6 : vector<16x1xf32>
    %cst_6 = arith.constant 9.99999997E-7 : f32
    %8 = vector.broadcast %cst_6 : f32 to vector<16x1xf32>
    %9 = arith.addf %7, %8 : vector<16x1xf32>
    %10 = math.rsqrt %9 : vector<16x1xf32>
    %11 = vector.broadcast %10 : vector<16x1xf32> to vector<16x32xf32>
    %12 = arith.mulf %0, %11 : vector<16x32xf32>
    %13 = vector.broadcast %2 : vector<1x32xf32> to vector<16x32xf32>
    %14 = arith.mulf %13, %12 : vector<16x32xf32>
    %c0_7 = arith.constant 0 : index
    %c0_8 = arith.constant 0 : index
    %15 = vector.load %arg5[%c0_7, %c0_8] : memref<1x32xf32, #tpu.memory_space<vmem>>, vector<1x32xf32>
    %16 = arith.mulf %1, %1 : vector<32x32xf32>
    %cst_9 = arith.constant dense<0.000000e+00> : vector<32xf32>
    %17 = vector.multi_reduction <add>, %16, %cst_9 [1] : vector<32x32xf32> to vector<32xf32>
    %18 = vector.shape_cast %17 : vector<32xf32> to vector<32x1xf32>
    %cst_10 = arith.constant 3.200000e+01 : f32
    %19 = vector.broadcast %cst_10 : f32 to vector<32x1xf32>
    %20 = arith.divf %18, %19 : vector<32x1xf32>
    %cst_11 = arith.constant 9.99999997E-7 : f32
    %21 = vector.broadcast %cst_11 : f32 to vector<32x1xf32>
    %22 = arith.addf %20, %21 : vector<32x1xf32>
    %23 = math.rsqrt %22 : vector<32x1xf32>
    %24 = vector.broadcast %23 : vector<32x1xf32> to vector<32x32xf32>
    %25 = arith.mulf %1, %24 : vector<32x32xf32>
    %26 = vector.broadcast %15 : vector<1x32xf32> to vector<32x32xf32>
    %27 = arith.mulf %26, %25 : vector<32x32xf32>
    %28 = arith.truncf %14 : vector<16x32xf32> to vector<16x32xbf16>
    %29 = arith.truncf %27 : vector<32x32xf32> to vector<32x32xbf16>
    %30 = vector.extract_strided_slice %29 {offsets = [0, 0], sizes = [16, 32], strides = [1, 1]} : vector<32x32xbf16> to vector<16x32xbf16>
    %c0_12 = arith.constant 0 : index
    %c0_13 = arith.constant 0 : index
    %31 = vector.load %arg13[%c0_12, %c0_13] : memref<48x32xbf16, #tpu.memory_space<vmem>>, vector<16x32xbf16>
    tpu.vector_store %arg13[%c0_12, %c0_13], %30 {strides = array<i32>} : memref<48x32xbf16, #tpu.memory_space<vmem>>, vector<16x32xbf16>,
    %32 = vector.extract_strided_slice %28 {offsets = [0, 0], sizes = [8, 32], strides = [1, 1]} : vector<16x32xbf16> to vector<8x32xbf16>
    %c16 = arith.constant 16 : index
    %c0_14 = arith.constant 0 : index
    %33 = vector.load %arg13[%c16, %c0_14] : memref<48x32xbf16, #tpu.memory_space<vmem>>, vector<8x32xbf16>
    tpu.vector_store %arg13[%c16, %c0_14], %32 {strides = array<i32>} : memref<48x32xbf16, #tpu.memory_space<vmem>>, vector<8x32xbf16>,
    %34 = vector.extract_strided_slice %29 {offsets = [16, 0], sizes = [16, 32], strides = [1, 1]} : vector<32x32xbf16> to vector<16x32xbf16>
    %c24 = arith.constant 24 : index
    %c0_15 = arith.constant 0 : index
    %35 = vector.load %arg13[%c24, %c0_15] : memref<48x32xbf16, #tpu.memory_space<vmem>>, vector<16x32xbf16>
    tpu.vector_store %arg13[%c24, %c0_15], %34 {strides = array<i32>} : memref<48x32xbf16, #tpu.memory_space<vmem>>, vector<16x32xbf16>,
    %36 = vector.extract_strided_slice %28 {offsets = [8, 0], sizes = [8, 32], strides = [1, 1]} : vector<16x32xbf16> to vector<8x32xbf16>
    %c40 = arith.constant 40 : index
    %c0_16 = arith.constant 0 : index
    %37 = vector.load %arg13[%c40, %c0_16] : memref<48x32xbf16, #tpu.memory_space<vmem>>, vector<8x32xbf16>
    tpu.vector_store %arg13[%c40, %c0_16], %36 {strides = array<i32>} : memref<48x32xbf16, #tpu.memory_space<vmem>>, vector<8x32xbf16>,
    %c0_17 = arith.constant 0 : index
    %c0_18 = arith.constant 0 : index
    %38 = vector.load %arg6[%c0_17, %c0_18] : memref<32x32xbf16, #tpu.memory_space<vmem>>, vector<32x32xbf16>
    %cst_19 = arith.constant dense<0.000000e+00> : vector<16x32xf32>
    %39 = tpu.matmul %28, %38, %cst_19 {dimension_numbers = #tpu.dot_dimension_numbers<[1], [0], [0], [1], [0, 0, 1, 1], [], []>} : vector<16x32xbf16>, vector<32x32xbf16>, vector<16x32xf32> -> vector<16x32xf32>
    %40 = arith.truncf %39 : vector<16x32xf32> to vector<16x32xbf16>
    %c0_20 = arith.constant 0 : index
    %c0_21 = arith.constant 0 : index
    %41 = vector.load %arg13[%c0_20, %c0_21] : memref<48x32xbf16, #tpu.memory_space<vmem>>, vector<48x32xbf16>
    %c0_22 = arith.constant 0 : index
    %c0_23 = arith.constant 0 : index
    %42 = vector.load %arg7[%c0_22, %c0_23] : memref<32x64xbf16, #tpu.memory_space<vmem>>, vector<32x64xbf16>
    %cst_24 = arith.constant dense<0.000000e+00> : vector<48x64xf32>
    %43 = tpu.matmul %41, %42, %cst_24 {dimension_numbers = #tpu.dot_dimension_numbers<[1], [0], [0], [1], [0, 0, 1, 1], [], []>} : vector<48x32xbf16>, vector<32x64xbf16>, vector<48x64xf32> -> vector<48x64xf32>
    %44 = arith.truncf %43 : vector<48x64xf32> to vector<48x64xbf16>
    %c0_25 = arith.constant 0 : index
    %c0_26 = arith.constant 0 : index
    %45 = vector.load %arg3[%c0_25, %c0_26] : memref<96x64xbf16, #tpu.memory_space<vmem>>, vector<96x64xbf16>
    %46 = vector.extract_strided_slice %45 {offsets = [0, 0], sizes = [96, 32], strides = [1, 1]} : vector<96x64xbf16> to vector<96x32xbf16>
    %47 = vector.extract_strided_slice %40 {offsets = [0, 0], sizes = [8, 32], strides = [1, 1]} : vector<16x32xbf16> to vector<8x32xbf16>
    %48 = vector.extract_strided_slice %44 {offsets = [0, 0], sizes = [24, 64], strides = [1, 1]} : vector<48x64xbf16> to vector<24x64xbf16>
    %49 = tpu.concatenate %48, %48, %48, %48 in 0 : vector<24x64xbf16>, vector<24x64xbf16>, vector<24x64xbf16>, vector<24x64xbf16> -> vector<96x64xbf16>
    %50 = arith.mulf %49, %45 : vector<96x64xbf16>
    %51 = vector.extract_strided_slice %50 {offsets = [0, 0], sizes = [96, 32], strides = [1, 1]} : vector<96x64xbf16> to vector<96x32xbf16>
    %cst_27 = arith.constant dense<0.000000e+00> : vector<8x96xf32>
    %52 = tpu.matmul %47, %51, %cst_27 {dimension_numbers = #tpu.dot_dimension_numbers<[1], [1], [0], [0], [0, 0, 1, 0], [], []>} : vector<8x32xbf16>, vector<96x32xbf16>, vector<8x96xf32> -> vector<8x96xf32>
    %cst_28 = arith.constant dense<0xFF800000> : vector<8xf32>
    %53 = vector.multi_reduction <maximumf>, %52, %cst_28 [1] : vector<8x96xf32> to vector<8xf32>
    %54 = vector.shape_cast %53 : vector<8xf32> to vector<8x1xf32>
    %55 = vector.broadcast %54 : vector<8x1xf32> to vector<8x96xf32>
    %56 = arith.subf %52, %55 : vector<8x96xf32>
    %57 = math.exp %56 : vector<8x96xf32>
    %58 = arith.truncf %57 : vector<8x96xf32> to vector<8x96xbf16>
    %59 = vector.extract_strided_slice %50 {offsets = [0, 32], sizes = [96, 32], strides = [1, 1]} : vector<96x64xbf16> to vector<96x32xbf16>
    %cst_29 = arith.constant dense<0.000000e+00> : vector<8x32xf32>
    %60 = tpu.matmul %58, %59, %cst_29 {dimension_numbers = #tpu.dot_dimension_numbers<[1], [0], [0], [1], [0, 0, 1, 1], [], []>} : vector<8x96xbf16>, vector<96x32xbf16>, vector<8x32xf32> -> vector<8x32xf32>
    %cst_30 = arith.constant dense<0.000000e+00> : vector<8x32xf32>
    %61 = tpu.matmul %58, %46, %cst_30 {dimension_numbers = #tpu.dot_dimension_numbers<[1], [0], [0], [1], [0, 0, 1, 1], [], []>} : vector<8x96xbf16>, vector<96x32xbf16>, vector<8x32xf32> -> vector<8x32xf32>
    %62 = tpu.reciprocal %61 {approx = true} : vector<8x32xf32> -> vector<8x32xf32>
    %63 = arith.mulf %60, %62 : vector<8x32xf32>
    %64 = vector.extract_strided_slice %40 {offsets = [8, 0], sizes = [8, 32], strides = [1, 1]} : vector<16x32xbf16> to vector<8x32xbf16>
    %65 = vector.extract_strided_slice %44 {offsets = [24, 0], sizes = [24, 64], strides = [1, 1]} : vector<48x64xbf16> to vector<24x64xbf16>
    %66 = tpu.concatenate %65, %65, %65, %65 in 0 : vector<24x64xbf16>, vector<24x64xbf16>, vector<24x64xbf16>, vector<24x64xbf16> -> vector<96x64xbf16>
    %67 = arith.mulf %66, %45 : vector<96x64xbf16>
    %68 = vector.extract_strided_slice %67 {offsets = [0, 0], sizes = [96, 32], strides = [1, 1]} : vector<96x64xbf16> to vector<96x32xbf16>
    %cst_31 = arith.constant dense<0.000000e+00> : vector<8x96xf32>
    %69 = tpu.matmul %64, %68, %cst_31 {dimension_numbers = #tpu.dot_dimension_numbers<[1], [1], [0], [0], [0, 0, 1, 0], [], []>} : vector<8x32xbf16>, vector<96x32xbf16>, vector<8x96xf32> -> vector<8x96xf32>
    %cst_32 = arith.constant dense<0xFF800000> : vector<8xf32>
    %70 = vector.multi_reduction <maximumf>, %69, %cst_32 [1] : vector<8x96xf32> to vector<8xf32>
    %71 = vector.shape_cast %70 : vector<8xf32> to vector<8x1xf32>
    %72 = vector.broadcast %71 : vector<8x1xf32> to vector<8x96xf32>
    %73 = arith.subf %69, %72 : vector<8x96xf32>
    %74 = math.exp %73 : vector<8x96xf32>
    %75 = arith.truncf %74 : vector<8x96xf32> to vector<8x96xbf16>
    %76 = vector.extract_strided_slice %67 {offsets = [0, 32], sizes = [96, 32], strides = [1, 1]} : vector<96x64xbf16> to vector<96x32xbf16>
    %cst_33 = arith.constant dense<0.000000e+00> : vector<8x32xf32>
    %77 = tpu.matmul %75, %76, %cst_33 {dimension_numbers = #tpu.dot_dimension_numbers<[1], [0], [0], [1], [0, 0, 1, 1], [], []>} : vector<8x96xbf16>, vector<96x32xbf16>, vector<8x32xf32> -> vector<8x32xf32>
    %cst_34 = arith.constant dense<0.000000e+00> : vector<8x32xf32>
    %78 = tpu.matmul %75, %46, %cst_34 {dimension_numbers = #tpu.dot_dimension_numbers<[1], [0], [0], [1], [0, 0, 1, 1], [], []>} : vector<8x96xbf16>, vector<96x32xbf16>, vector<8x32xf32> -> vector<8x32xf32>
    %79 = tpu.reciprocal %78 {approx = true} : vector<8x32xf32> -> vector<8x32xf32>
    %80 = arith.mulf %77, %79 : vector<8x32xf32>
    %81 = tpu.concatenate %63, %80 in 0 : vector<8x32xf32>, vector<8x32xf32> -> vector<16x32xf32>
    %82 = arith.truncf %81 : vector<16x32xf32> to vector<16x32xbf16>
    %c0_35 = arith.constant 0 : index
    %c0_36 = arith.constant 0 : index
    %83 = vector.load %arg8[%c0_35, %c0_36] : memref<32x32xbf16, #tpu.memory_space<vmem>>, vector<32x32xbf16>
    %cst_37 = arith.constant dense<0.000000e+00> : vector<16x32xf32>
    %84 = tpu.matmul %82, %83, %cst_37 {dimension_numbers = #tpu.dot_dimension_numbers<[1], [0], [0], [1], [0, 0, 1, 1], [], []>} : vector<16x32xbf16>, vector<32x32xbf16>, vector<16x32xf32> -> vector<16x32xf32>
    %85 = arith.addf %0, %84 : vector<16x32xf32>
    %c0_38 = arith.constant 0 : index
    %c0_39 = arith.constant 0 : index
    %86 = vector.load %arg9[%c0_38, %c0_39] : memref<1x32xf32, #tpu.memory_space<vmem>>, vector<1x32xf32>
    %87 = arith.mulf %85, %85 : vector<16x32xf32>
    %cst_40 = arith.constant dense<0.000000e+00> : vector<16xf32>
    %88 = vector.multi_reduction <add>, %87, %cst_40 [1] : vector<16x32xf32> to vector<16xf32>
    %89 = vector.shape_cast %88 : vector<16xf32> to vector<16x1xf32>
    %cst_41 = arith.constant 3.200000e+01 : f32
    %90 = vector.broadcast %cst_41 : f32 to vector<16x1xf32>
    %91 = arith.divf %89, %90 : vector<16x1xf32>
    %cst_42 = arith.constant 9.99999997E-7 : f32
    %92 = vector.broadcast %cst_42 : f32 to vector<16x1xf32>
    %93 = arith.addf %91, %92 : vector<16x1xf32>
    %94 = math.rsqrt %93 : vector<16x1xf32>
    %95 = vector.broadcast %94 : vector<16x1xf32> to vector<16x32xf32>
    %96 = arith.mulf %85, %95 : vector<16x32xf32>
    %97 = vector.broadcast %86 : vector<1x32xf32> to vector<16x32xf32>
    %98 = arith.mulf %97, %96 : vector<16x32xf32>
    %99 = arith.truncf %98 : vector<16x32xf32> to vector<16x32xbf16>
    %c0_43 = arith.constant 0 : index
    %c0_44 = arith.constant 0 : index
    %100 = vector.load %arg10[%c0_43, %c0_44] : memref<32x256xbf16, #tpu.memory_space<vmem>>, vector<32x256xbf16>
    %cst_45 = arith.constant dense<0.000000e+00> : vector<16x256xf32>
    %101 = tpu.matmul %99, %100, %cst_45 {dimension_numbers = #tpu.dot_dimension_numbers<[1], [0], [0], [1], [0, 0, 1, 1], [], []>} : vector<16x32xbf16>, vector<32x256xbf16>, vector<16x256xf32> -> vector<16x256xf32>
    %102 = vector.extract_strided_slice %101 {offsets = [0, 0], sizes = [16, 128], strides = [1, 1]} : vector<16x256xf32> to vector<16x128xf32>
    %103 = vector.extract_strided_slice %101 {offsets = [0, 128], sizes = [16, 128], strides = [1, 1]} : vector<16x256xf32> to vector<16x128xf32>
    %104 = arith.negf %102 : vector<16x128xf32>
    %105 = math.exp %104 : vector<16x128xf32>
    %cst_46 = arith.constant 1.000000e+00 : f32
    %106 = vector.broadcast %cst_46 : f32 to vector<16x128xf32>
    %107 = arith.addf %106, %105 : vector<16x128xf32>
    %108 = arith.divf %106, %107 : vector<16x128xf32>
    %109 = arith.mulf %102, %108 : vector<16x128xf32>
    %110 = arith.mulf %109, %103 : vector<16x128xf32>
    %111 = arith.truncf %110 : vector<16x128xf32> to vector<16x128xbf16>
    %c0_47 = arith.constant 0 : index
    %c0_48 = arith.constant 0 : index
    %112 = vector.load %arg11[%c0_47, %c0_48] : memref<128x32xbf16, #tpu.memory_space<vmem>>, vector<128x32xbf16>
    %cst_49 = arith.constant dense<0.000000e+00> : vector<16x32xf32>
    %113 = tpu.matmul %111, %112, %cst_49 {dimension_numbers = #tpu.dot_dimension_numbers<[1], [0], [0], [1], [0, 0, 1, 1], [], []>} : vector<16x128xbf16>, vector<128x32xbf16>, vector<16x32xf32> -> vector<16x32xf32>
    %114 = arith.addf %85, %113 : vector<16x32xf32>
    %c0_50 = arith.constant 0 : index
    %c0_51 = arith.constant 0 : index
    %115 = vector.load %arg12[%c0_50, %c0_51] : memref<16x32xf32, #tpu.memory_space<vmem>>, vector<16x32xf32>
    tpu.vector_store %arg12[%c0_50, %c0_51], %114 {strides = array<i32>} : memref<16x32xf32, #tpu.memory_space<vmem>>, vector<16x32xf32>,
    return
  }
  func.func @transform_0(%arg0: i32) -> (i32, i32) {
    %c0_i32 = arith.constant 0 : i32
    %c0_i32_0 = arith.constant 0 : i32
    return %arg0, %c0_i32 : i32, i32
  }
  func.func @transform_1(%arg0: i32) -> (i32, i32) {
    %c0_i32 = arith.constant 0 : i32
    %c0_i32_0 = arith.constant 0 : i32
    return %arg0, %c0_i32 : i32, i32
  }
  func.func @transform_2(%arg0: i32) -> (i32, i32) {
    %c0_i32 = arith.constant 0 : i32
    %c0_i32_0 = arith.constant 0 : i32
    %c0_i32_1 = arith.constant 0 : i32
    return %c0_i32, %c0_i32_0 : i32, i32
  }
  func.func @transform_3(%arg0: i32) -> (i32, i32) {
    %c0_i32 = arith.constant 0 : i32
    %c0_i32_0 = arith.constant 0 : i32
    %c0_i32_1 = arith.constant 0 : i32
    return %c0_i32, %c0_i32_0 : i32, i32
  }
  func.func @transform_4(%arg0: i32) -> (i32, i32) {
    %c0_i32 = arith.constant 0 : i32
    %c0_i32_0 = arith.constant 0 : i32
    %c0_i32_1 = arith.constant 0 : i32
    return %c0_i32, %c0_i32_0 : i32, i32
  }
  func.func @transform_5(%arg0: i32) -> (i32, i32) {
    %c0_i32 = arith.constant 0 : i32
    %c0_i32_0 = arith.constant 0 : i32
    %c0_i32_1 = arith.constant 0 : i32
    return %c0_i32, %c0_i32_0 : i32, i32
  }
  func.func @transform_6(%arg0: i32) -> (i32, i32) {
    %c0_i32 = arith.constant 0 : i32
    %c0_i32_0 = arith.constant 0 : i32
    %c0_i32_1 = arith.constant 0 : i32
    return %c0_i32, %c0_i32_0 : i32, i32
  }
  func.func @transform_7(%arg0: i32) -> (i32, i32) {
    %c0_i32 = arith.constant 0 : i32
    %c0_i32_0 = arith.constant 0 : i32
    %c0_i32_1 = arith.constant 0 : i32
    return %c0_i32, %c0_i32_0 : i32, i32
  }
  func.func @transform_8(%arg0: i32) -> (i32, i32) {
    %c0_i32 = arith.constant 0 : i32
    %c0_i32_0 = arith.constant 0 : i32
    %c0_i32_1 = arith.constant 0 : i32
    return %c0_i32, %c0_i32_0 : i32, i32
  }
  func.func @transform_9(%arg0: i32) -> (i32, i32) {
    %c0_i32 = arith.constant 0 : i32
    %c0_i32_0 = arith.constant 0 : i32
    %c0_i32_1 = arith.constant 0 : i32
    return %c0_i32, %c0_i32_0 : i32, i32
  }
  func.func @transform_10(%arg0: i32) -> (i32, i32) {
    %c0_i32 = arith.constant 0 : i32
    %c0_i32_0 = arith.constant 0 : i32
    %c0_i32_1 = arith.constant 0 : i32
    return %c0_i32, %c0_i32_0 : i32, i32
  }
  func.func @transform_11(%arg0: i32) -> (i32, i32) {
    %c0_i32 = arith.constant 0 : i32
    %c0_i32_0 = arith.constant 0 : i32
    return %arg0, %c0_i32 : i32, i32
  }
}

</mosaic_0001>

<llo_original>
// kernel: tpu_custom_call.1
$region0: #{tpu_custom_call.1}
  #allocation0 [shape = 'u32[]', space=smem, size = 0x4, offset = 0x4, fixed_abs, tag = 'smem constant byte address 0x4 - core index']
  #allocation1 [shape = 'u32[144,128]{1,0:T(1,128)}', space=vmem, size = 0x12000, scoped, tag = 'internal scratch']
  #allocation2 [shape = 'bf16[48,32]{1,0:T(16,128)(2,1)}', space=vmem, size = 0x3000, scoped, tag = 'scratch operand']
  %s0 = inlined_call_operand.vmem [shape: f32[16,32], index: 0, kind: input, shape index: {}]
  %s1 = inlined_call_operand.vmem [shape: f32[32,32], index: 1, kind: input, shape index: {}]
  %s2 = inlined_call_operand.vmem [shape: bf16[96,64], index: 2, kind: input, shape index: {}]
  %s3 = inlined_call_operand.vmem [shape: f32[1,32], index: 3, kind: input, shape index: {}]
  %s4 = inlined_call_operand.vmem [shape: f32[1,32], index: 4, kind: input, shape index: {}]
  %s5 = inlined_call_operand.vmem [shape: bf16[32,32], index: 5, kind: input, shape index: {}]
  %s6 = inlined_call_operand.vmem [shape: bf16[32,64], index: 6, kind: input, shape index: {}]
  %s7 = inlined_call_operand.vmem [shape: bf16[32,32], index: 7, kind: input, shape index: {}]
  %s8 = inlined_call_operand.vmem [shape: f32[1,32], index: 8, kind: input, shape index: {}]
  %s9 = inlined_call_operand.vmem [shape: bf16[32,256], index: 9, kind: input, shape index: {}]
  %s10 = inlined_call_operand.vmem [shape: bf16[128,32], index: 10, kind: input, shape index: {}]
  %s11 = inlined_call_operand.hbm [shape: f32[16,32], index: 11, kind: output, shape index: {}]
  %s12 = sld [smem:[#allocation0]]
  $region54: #{tpu_custom_call.1} parent=0
    _
  %s14 = ssub.s32 1, %s12
  %s15 = scalar_select 0, %s14, %s12
  $region1: #{tpu_custom_call.1} parent=0
    #allocation3 [shape = 'u8[8192]{0}', space=vmem, size = 0x2000, scoped, tag = 'output window, operand 0, single buffered']
    #allocation4 [shape = 's32[1]{0}', space=sflag, size = 0x4, scoped, tag = 'scoped memory for tpu_custom_call.1']
    %16 = vsyncpa [#allocation4], 0
    // Predicated region
    $region2: #{tpu_custom_call.1} parent=1 // pred_check
      _
    $region3: #{tpu_custom_call.1} parent=1 // pred_check_branch
      %18 = sbr.rel (0) target = $region5
    $region4: #{tpu_custom_call.1} parent=1 // pred_region
      _
    $region5: #{tpu_custom_call.1} parent=1 // pred_fallthru
      _
    // Predicated region
    $region6: #{tpu_custom_call.1} parent=1 // pred_check
      _
    $region7: #{tpu_custom_call.1} parent=1 // pred_check_branch
      %20 = sbr.rel (0) target = $region9
    $region8: #{tpu_custom_call.1} parent=1 // pred_region
      _
    $region9: #{tpu_custom_call.1} parent=1 // pred_fallthru
      _
    // Predicated region
    $region10: #{tpu_custom_call.1} parent=1 // pred_check
      _
    $region11: #{tpu_custom_call.1} parent=1 // pred_check_branch
      %22 = sbr.rel (0) target = $region13
    $region12: #{tpu_custom_call.1} parent=1 // pred_region
      _
    $region13: #{tpu_custom_call.1} parent=1 // pred_fallthru
      _
    // Predicated region
    $region14: #{tpu_custom_call.1} parent=1 // pred_check
      _
    $region15: #{tpu_custom_call.1} parent=1 // pred_check_branch
      %24 = sbr.rel (0) target = $region17
    $region16: #{tpu_custom_call.1} parent=1 // pred_region
      _
    $region17: #{tpu_custom_call.1} parent=1 // pred_fallthru
      _
    // Predicated region
    $region18: #{tpu_custom_call.1} parent=1 // pred_check
      _
    $region19: #{tpu_custom_call.1} parent=1 // pred_check_branch
      %26 = sbr.rel (0) target = $region21
    $region20: #{tpu_custom_call.1} parent=1 // pred_region
      _
    $region21: #{tpu_custom_call.1} parent=1 // pred_fallthru
      _
    // Predicated region
    $region22: #{tpu_custom_call.1} parent=1 // pred_check
      _
    $region23: #{tpu_custom_call.1} parent=1 // pred_check_branch
      %28 = sbr.rel (0) target = $region25
    $region24: #{tpu_custom_call.1} parent=1 // pred_region
      _
    $region25: #{tpu_custom_call.1} parent=1 // pred_fallthru
      _
    // Predicated region
    $region26: #{tpu_custom_call.1} parent=1 // pred_check
      _
    $region27: #{tpu_custom_call.1} parent=1 // pred_check_branch
      %30 = sbr.rel (0) target = $region29
    $region28: #{tpu_custom_call.1} parent=1 // pred_region
      _
    $region29: #{tpu_custom_call.1} parent=1 // pred_fallthru
      _
    // Predicated region
    $region30: #{tpu_custom_call.1} parent=1 // pred_check
      _
    $region31: #{tpu_custom_call.1} parent=1 // pred_check_branch
      %32 = sbr.rel (0) target = $region33
    $region32: #{tpu_custom_call.1} parent=1 // pred_region
      _
    $region33: #{tpu_custom_call.1} parent=1 // pred_fallthru
      _
    // Predicated region
    $region34: #{tpu_custom_call.1} parent=1 // pred_check
      _
    $region35: #{tpu_custom_call.1} parent=1 // pred_check_branch
      %34 = sbr.rel (0) target = $region37
    $region36: #{tpu_custom_call.1} parent=1 // pred_region
      _
    $region37: #{tpu_custom_call.1} parent=1 // pred_fallthru
      _
    // Predicated region
    $region38: #{tpu_custom_call.1} parent=1 // pred_check
      _
    $region39: #{tpu_custom_call.1} parent=1 // pred_check_branch
      %36 = sbr.rel (0) target = $region41
    $region40: #{tpu_custom_call.1} parent=1 // pred_region
      _
    $region41: #{tpu_custom_call.1} parent=1 // pred_fallthru
      _
    // Predicated region
    $region42: #{tpu_custom_call.1} parent=1 // pred_check
      _
    $region43: #{tpu_custom_call.1} parent=1 // pred_check_branch
      %38 = sbr.rel (0) target = $region45
    $region44: #{tpu_custom_call.1} parent=1 // pred_region
      _
    $region45: #{tpu_custom_call.1} parent=1 // pred_fallthru
      _
    %v40 = vld [vmem:[%s0] sm:$0xff]
    %v41 = vld [vmem:[%s0 + $0x8] sm:$0xff]
    %v42 = vld [vmem:[%s1] sm:$0xff]
    %v43 = vld [vmem:[%s1 + $0x8] sm:$0xff]
    %v44 = vld [vmem:[%s1 + $0x10] sm:$0xff]
    %v45 = vld [vmem:[%s1 + $0x18] sm:$0xff]
    %v46 = vld [vmem:[%s3] sm:$0x1]
    %v47 = vmul.f32 %v40, %v40
    %v48 = vmul.f32 %v41, %v41
    %vm49 = vcmask 261120
    %v50 = vsel %vm49, %v47, 0.0
    %51 = vadd.xlane.f32.xlu0 %v50
    %v52 = vpop.xlane.xlu0 %51
    %v53 = vsel %vm49, %v48, 0.0
    %54 = vadd.xlane.f32.xlu0 %v53
    %v55 = vpop.xlane.xlu0 %54
    %v56 = vrcp.pop 32.0
    %v57 = vmul.f32 %v52, %v56
    %v58 = vmul.f32 %v55, %v56
    %v59 = vadd.f32 %v57, 1e-06
    %v60 = vadd.f32 %v58, 1e-06
    %v61 = vrsqrt.pop %v59
    %v62 = vrsqrt.pop %v60
    %v63 = vmul.f32 %v40, %v61
    %v64 = vmul.f32 %v41, %v62
    %v66 = vlaneseq
    %v67 = vshrl.u32 %v66, 7
    %v68 = vsub.s32 0, %v67
    %v69 = vrot.slane %v46, %v68
    %v71 = vmul.f32 %v69, %v63
    %v72 = vmul.f32 %v69, %v64
    %v73 = vld [vmem:[%s4] sm:$0x1]
    %v74 = vmul.f32 %v42, %v42
    %v75 = vmul.f32 %v43, %v43
    %v76 = vmul.f32 %v44, %v44
    %v77 = vmul.f32 %v45, %v45
    %v78 = vsel %vm49, %v74, 0.0
    %79 = vadd.xlane.f32.xlu0 %v78
    %v80 = vpop.xlane.xlu0 %79
    %v81 = vsel %vm49, %v75, 0.0
    %82 = vadd.xlane.f32.xlu0 %v81
    %v83 = vpop.xlane.xlu0 %82
    %v84 = vsel %vm49, %v76, 0.0
    %85 = vadd.xlane.f32.xlu0 %v84
    %v86 = vpop.xlane.xlu0 %85
    %v87 = vsel %vm49, %v77, 0.0
    %88 = vadd.xlane.f32.xlu0 %v87
    %v89 = vpop.xlane.xlu0 %88
    %v90 = vmul.f32 %v80, %v56
    %v91 = vmul.f32 %v83, %v56
    %v92 = vmul.f32 %v86, %v56
    %v93 = vmul.f32 %v89, %v56
    %v94 = vadd.f32 %v90, 1e-06
    %v95 = vadd.f32 %v91, 1e-06
    %v96 = vadd.f32 %v92, 1e-06
    %v97 = vadd.f32 %v93, 1e-06
    %v98 = vrsqrt.pop %v94
    %v99 = vrsqrt.pop %v95
    %v100 = vrsqrt.pop %v96
    %v101 = vrsqrt.pop %v97
    %v102 = vmul.f32 %v42, %v98
    %v103 = vmul.f32 %v43, %v99
    %v104 = vmul.f32 %v44, %v100
    %v105 = vmul.f32 %v45, %v101
    %v107 = vlaneseq
    %v108 = vshrl.u32 %v107, 7
    %v109 = vsub.s32 0, %v108
    %v110 = vrot.slane %v73, %v109
    %v112 = vmul.f32 %v110, %v102
    %v113 = vmul.f32 %v110, %v103
    %v114 = vmul.f32 %v110, %v104
    %v115 = vmul.f32 %v110, %v105
    %v116 = vpack.c.bf16 %v72, %v71
    %v117 = vpack.c.bf16 %v113, %v112
    %v118 = vpack.c.bf16 %v115, %v114
    %119 = vst.msk [vmem:[#allocation2] sm:$0xff] %vm49, %v117
    %vm120 = vcmask 257024
    %121 = vst.msk [vmem:[#allocation2 + $0x8] sm:$0xf] %vm120, %v116
    %v123 = vrot.slane %v118, 4
    %vm125 = vcmask 261124
    %126 = vst.msk [vmem:[#allocation2 + $0x8] sm:$0xf0] %vm125, %v123
    %127 = vst.msk [vmem:[#allocation2 + $0x10] sm:$0xf] %vm120, %v123
    %128 = vst.msk [vmem:[#allocation2 + $0x10] sm:$0xf0] %vm125, %v116
    %v129 = vld [vmem:[%s5] sm:$0xf]
    %v130 = vld [vmem:[%s5 + $0x4] sm:$0xf]
    %v131 = vld [vmem:[%s5 + $0x8] sm:$0xf]
    %v132 = vld [vmem:[%s5 + $0xc] sm:$0xf]
    %v137 = vunpack.c.l.b16 %v129
    %v138 = vunpack.c.l.b16 %v130
    %v139 = vunpack.c.l.b16 %v131
    %v140 = vunpack.c.l.b16 %v132
    %v141 = vpack.c.b16 %v138, %v137
    %v142 = vpack.c.b16 %v140, %v139
    %v146 = vsel %vm49, %v116, 0
    %148 = vmatprep.subr.bf16.mxu0 0
    %149 = vmatpush1.bf16.msra.mxu0 %v141
    %150 = vmatprep.subr.bf16.mxu0 0
    %151 = vmatpush1.bf16.msra.mxu0 %v142
    %152 = vmatprep.subr.bf16.mxu0 0
    %153 = vmatpush1.bf16.msra.mxu0 0
    %154 = vmatprep.subr.bf16.mxu0 0
    %155 = vmatpush1.bf16.msra.mxu0 0
    %156 = vmatprep.subr.bf16.mxu0 0
    %157 = vmatpush1.bf16.msra.mxu0 0
    %158 = vmatprep.subr.bf16.mxu0 0
    %159 = vmatpush1.bf16.msra.mxu0 0
    %160 = vmatprep.subr.bf16.mxu0 0
    %161 = vmatpush1.bf16.msra.mxu0 0
    %162 = vmatprep.subr.bf16.mxu0 0
    %163 = vmatpush1.bf16.msra.mxu0 0
    %164 = vmatprep.subr.bf16.mxu0 0
    %165 = vmatpush1.bf16.msra.mxu0 0
    %166 = vmatprep.subr.bf16.mxu0 0
    %167 = vmatpush1.bf16.msra.mxu0 0
    %168 = vmatprep.subr.bf16.mxu0 0
    %169 = vmatpush1.bf16.msra.mxu0 0
    %170 = vmatprep.subr.bf16.mxu0 0
    %171 = vmatpush1.bf16.msra.mxu0 0
    %172 = vmatprep.subr.bf16.mxu0 0
    %173 = vmatpush1.bf16.msra.mxu0 0
    %174 = vmatprep.subr.bf16.mxu0 0
    %175 = vmatpush1.bf16.msra.mxu0 0
    %176 = vmatprep.subr.bf16.mxu0 0
    %177 = vmatpush1.bf16.msra.mxu0 0
    %178 = vmatprep.subr.bf16.mxu0 0
    %179 = vmatpush1.bf16.msra.mxu0 0
    %180 = vmatprep.mubr.bf16.mxu0 0
    %181 = vmatmul.mubr.bf16.gmra.mrb[0].mxu0 %v146
    %v182 = vpop.f32.mrb[0].mxu0
    %v183 = vadd.f32 0.0, %v182
    %v184 = vpop.f32.mrb[0].mxu0
    %v185 = vpop.f32.mrb[0].mxu0
    %v186 = vadd.f32 0.0, %v185
    %v187 = vpop.f32.mrb[0].mxu0
    %188 = vdwg.mxu0
    %v189 = vpack.c.bf16 %v186, %v183
    %v190 = vld [vmem:[#allocation2] sm:$0xff]
    %v191 = vld [vmem:[#allocation2 + $0x8] sm:$0xff]
    %v192 = vld [vmem:[#allocation2 + $0x10] sm:$0xff]
    %v193 = vld [vmem:[%s6] sm:$0xf]
    %v194 = vld [vmem:[%s6 + $0x4] sm:$0xf]
    %v195 = vld [vmem:[%s6 + $0x8] sm:$0xf]
    %v196 = vld [vmem:[%s6 + $0xc] sm:$0xf]
    %v201 = vunpack.c.l.b16 %v193
    %v202 = vunpack.c.l.b16 %v194
    %v203 = vunpack.c.l.b16 %v195
    %v204 = vunpack.c.l.b16 %v196
    %v205 = vpack.c.b16 %v202, %v201
    %v206 = vpack.c.b16 %v204, %v203
    %v210 = vsel %vm49, %v190, 0
    %v213 = vsel %vm49, %v191, 0
    %v216 = vsel %vm49, %v192, 0
    %218 = vmatprep.subr.bf16.mxu0 0
    %219 = vmatpush1.bf16.msra.mxu0 %v205
    %220 = vmatprep.subr.bf16.mxu0 0
    %221 = vmatpush1.bf16.msra.mxu0 %v206
    %222 = vmatprep.subr.bf16.mxu0 0
    %223 = vmatpush1.bf16.msra.mxu0 0
    %224 = vmatprep.subr.bf16.mxu0 0
    %225 = vmatpush1.bf16.msra.mxu0 0
    %226 = vmatprep.subr.bf16.mxu0 0
    %227 = vmatpush1.bf16.msra.mxu0 0
    %228 = vmatprep.subr.bf16.mxu0 0
    %229 = vmatpush1.bf16.msra.mxu0 0
    %230 = vmatprep.subr.bf16.mxu0 0
    %231 = vmatpush1.bf16.msra.mxu0 0
    %232 = vmatprep.subr.bf16.mxu0 0
    %233 = vmatpush1.bf16.msra.mxu0 0
    %234 = vmatprep.subr.bf16.mxu0 0
    %235 = vmatpush1.bf16.msra.mxu0 0
    %236 = vmatprep.subr.bf16.mxu0 0
    %237 = vmatpush1.bf16.msra.mxu0 0
    %238 = vmatprep.subr.bf16.mxu0 0
    %239 = vmatpush1.bf16.msra.mxu0 0
    %240 = vmatprep.subr.bf16.mxu0 0
    %241 = vmatpush1.bf16.msra.mxu0 0
    %242 = vmatprep.subr.bf16.mxu0 0
    %243 = vmatpush1.bf16.msra.mxu0 0
    %244 = vmatprep.subr.bf16.mxu0 0
    %245 = vmatpush1.bf16.msra.mxu0 0
    %246 = vmatprep.subr.bf16.mxu0 0
    %247 = vmatpush1.bf16.msra.mxu0 0
    %248 = vmatprep.subr.bf16.mxu0 0
    %249 = vmatpush1.bf16.msra.mxu0 0
    %250 = vmatprep.mubr.bf16.mxu0 0
    %251 = vmatmul.mubr.bf16.gmra.mrb[0].mxu0 %v210
    %v252 = vpop.f32.mrb[0].mxu0
    %v253 = vadd.f32 0.0, %v252
    %v254 = vpop.f32.mrb[0].mxu0
    %v255 = vpop.f32.mrb[0].mxu0
    %v256 = vadd.f32 0.0, %v255
    %v257 = vpop.f32.mrb[0].mxu0
    %258 = vmatprep.mubr.bf16.mxu0 0
    %259 = vmatmul.mubr.bf16.gmra.mrb[0].mxu0 %v213
    %v260 = vpop.f32.mrb[0].mxu0
    %v261 = vadd.f32 0.0, %v260
    %v262 = vpop.f32.mrb[0].mxu0
    %v263 = vpop.f32.mrb[0].mxu0
    %v264 = vadd.f32 0.0, %v263
    %v265 = vpop.f32.mrb[0].mxu0
    %266 = vmatprep.mubr.bf16.mxu0 0
    %267 = vmatmul.mubr.bf16.gmra.mrb[0].mxu0 %v216
    %v268 = vpop.f32.mrb[0].mxu0
    %v269 = vadd.f32 0.0, %v268
    %v270 = vpop.f32.mrb[0].mxu0
    %v271 = vpop.f32.mrb[0].mxu0
    %v272 = vadd.f32 0.0, %v271
    %v273 = vpop.f32.mrb[0].mxu0
    %274 = vdwg.mxu0
    %v275 = vpack.c.bf16 %v256, %v253
    %v276 = vpack.c.bf16 %v264, %v261
    %v277 = vpack.c.bf16 %v272, %v269
    %v278 = vld [vmem:[%s2] sm:$0xf]
    %v279 = vld [vmem:[%s2 + $0x4] sm:$0xf]
    %v280 = vld [vmem:[%s2 + $0x8] sm:$0xf]
    %v281 = vld [vmem:[%s2 + $0xc] sm:$0xf]
    %v282 = vld [vmem:[%s2 + $0x10] sm:$0xf]
    %v283 = vld [vmem:[%s2 + $0x14] sm:$0xf]
    %v284 = vld [vmem:[%s2 + $0x18] sm:$0xf]
    %v285 = vld [vmem:[%s2 + $0x1c] sm:$0xf]
    %v286 = vld [vmem:[%s2 + $0x20] sm:$0xf]
    %v287 = vld [vmem:[%s2 + $0x24] sm:$0xf]
    %v288 = vld [vmem:[%s2 + $0x28] sm:$0xf]
    %v289 = vld [vmem:[%s2 + $0x2c] sm:$0xf]
    %vm292 = vcmask 1043456
    %v293 = vrot.slane %v275, 4
    %v294 = vrot.slane %v276, 4
    %v295 = vsel %vm292, %v293, %v294
    %vm297 = vcmask 1043456
    %v300 = vsel %vm297, %v276, %v293
    %v314 = vunpack.c.l.b16 %v278
    %v315 = vunpack.c.l.b16 %v279
    %v316 = vunpack.c.l.b16 %v280
    %v317 = vunpack.c.l.b16 %v281
    %v318 = vunpack.c.l.b16 %v282
    %v319 = vunpack.c.l.b16 %v283
    %v320 = vunpack.c.l.b16 %v284
    %v321 = vunpack.c.l.b16 %v285
    %v322 = vunpack.c.l.b16 %v286
    %v323 = vunpack.c.l.b16 %v287
    %v324 = vunpack.c.l.b16 %v288
    %v325 = vunpack.c.l.b16 %v289
    %v326 = vpack.c.b16 %v315, %v314
    %v327 = vpack.c.b16 %v317, %v316
    %v328 = vpack.c.b16 %v319, %v318
    %v329 = vpack.c.b16 %v321, %v320
    %v330 = vpack.c.b16 %v323, %v322
    %v331 = vpack.c.b16 %v325, %v324
    %v338 = vmul.bf16 %v275, %v326
    %v339 = vmul.bf16 %v300, %v327
    %v340 = vmul.bf16 %v295, %v328
    %v341 = vmul.bf16 %v275, %v329
    %v342 = vmul.bf16 %v300, %v330
    %v343 = vmul.bf16 %v295, %v331
    %v345 = vsel %vm49, %v189, 0
    %v348 = vsel %vm49, %v338, 0
    %v351 = vsel %vm49, %v339, 0
    %v354 = vsel %vm49, %v340, 0
    %v357 = vsel %vm49, %v341, 0
    %v360 = vsel %vm49, %v342, 0
    %v363 = vsel %vm49, %v343, 0
    %365 = vmatprep.subr.bf16.mxu0 0
    %366 = vmatpush1.bf16.xpose.msra.mxu0 %v348
    %367 = vmatprep.subr.bf16.mxu0 0
    %368 = vmatpush1.bf16.xpose.msra.mxu0 %v351
    %369 = vmatprep.subr.bf16.mxu0 0
    %370 = vmatpush1.bf16.xpose.msra.mxu0 %v354
    %371 = vmatprep.subr.bf16.mxu0 0
    %372 = vmatpush1.bf16.xpose.msra.mxu0 %v357
    %373 = vmatprep.subr.bf16.mxu0 0
    %374 = vmatpush1.bf16.xpose.msra.mxu0 %v360
    %375 = vmatprep.subr.bf16.mxu0 0
    %376 = vmatpush1.bf16.xpose.msra.mxu0 %v363
    %377 = vmatprep.subr.bf16.mxu0 0
    %378 = vmatpush1.bf16.xpose.msra.mxu0 0
    %379 = vmatprep.subr.bf16.mxu0 0
    %380 = vmatpush1.bf16.xpose.msra.mxu0 0
    %381 = vmatprep.subr.bf16.mxu0 0
    %382 = vmatpush1.bf16.xpose.msra.mxu0 0
    %383 = vmatprep.subr.bf16.mxu0 0
    %384 = vmatpush1.bf16.xpose.msra.mxu0 0
    %385 = vmatprep.subr.bf16.mxu0 0
    %386 = vmatpush1.bf16.xpose.msra.mxu0 0
    %387 = vmatprep.subr.bf16.mxu0 0
    %388 = vmatpush1.bf16.xpose.msra.mxu0 0
    %389 = vmatprep.subr.bf16.mxu0 0
    %390 = vmatpush1.bf16.xpose.msra.mxu0 0
    %391 = vmatprep.subr.bf16.mxu0 0
    %392 = vmatpush1.bf16.xpose.msra.mxu0 0
    %393 = vmatprep.subr.bf16.mxu0 0
    %394 = vmatpush1.bf16.xpose.msra.mxu0 0
    %395 = vmatprep.subr.bf16.mxu0 0
    %396 = vmatpush1.bf16.xpose.msra.mxu0 0
    %397 = vmatprep.mubr.bf16.mxu0 0
    %398 = vmatmul.mubr.bf16.gmra.mrb[0].mxu0 %v345
    %v399 = vpop.f32.mrb[0].mxu0
    %v400 = vadd.f32 0.0, %v399
    %v401 = vpop.f32.mrb[0].mxu0
    %v402 = vpop.f32.mrb[0].mxu0
    %v403 = vpop.f32.mrb[0].mxu0
    %404 = vdwg.mxu0
    %vm405 = vcmask 785408
    %v406 = vsel %vm405, %v400, -inf
    %407 = vmax.xlane.f32.xlu0 %v406
    %v408 = vpop.xlane.xlu0 %407
    %v409 = vsub.f32 %v400, %v408
    %v410 = vmul.f32 %v409, 1.442695
    %v411 = vpow.pop %v410
    %v412 = vpack.c.bf16 %v411, %v411
    %419 = vrot.lane.b32.xlu0 %v338, 96
    %v420 = vpop.permute.xlu0 %419
    %421 = vrot.lane.b32.xlu0 %v339, 96
    %v422 = vpop.permute.xlu0 %421
    %423 = vrot.lane.b32.xlu0 %v340, 96
    %v424 = vpop.permute.xlu0 %423
    %425 = vrot.lane.b32.xlu0 %v341, 96
    %v426 = vpop.permute.xlu0 %425
    %427 = vrot.lane.b32.xlu0 %v342, 96
    %v428 = vpop.permute.xlu0 %427
    %429 = vrot.lane.b32.xlu0 %v343, 96
    %v430 = vpop.permute.xlu0 %429
    %v438 = vsel %vm405, %v412, 0
    %440 = vmatprep.subr.bf16.mxu0 0
    %441 = vmatpush1.bf16.msra.mxu0 %v420
    %442 = vmatprep.subr.bf16.mxu0 0
    %443 = vmatpush1.bf16.msra.mxu0 %v422
    %444 = vmatprep.subr.bf16.mxu0 0
    %445 = vmatpush1.bf16.msra.mxu0 %v424
    %446 = vmatprep.subr.bf16.mxu0 0
    %447 = vmatpush1.bf16.msra.mxu0 %v426
    %448 = vmatprep.subr.bf16.mxu0 0
    %449 = vmatpush1.bf16.msra.mxu0 %v428
    %450 = vmatprep.subr.bf16.mxu0 0
    %451 = vmatpush1.bf16.msra.mxu0 %v430
    %452 = vmatprep.subr.bf16.mxu0 0
    %453 = vmatpush1.bf16.msra.mxu0 0
    %454 = vmatprep.subr.bf16.mxu0 0
    %455 = vmatpush1.bf16.msra.mxu0 0
    %456 = vmatprep.subr.bf16.mxu0 0
    %457 = vmatpush1.bf16.msra.mxu0 0
    %458 = vmatprep.subr.bf16.mxu0 0
    %459 = vmatpush1.bf16.msra.mxu0 0
    %460 = vmatprep.subr.bf16.mxu0 0
    %461 = vmatpush1.bf16.msra.mxu0 0
    %462 = vmatprep.subr.bf16.mxu0 0
    %463 = vmatpush1.bf16.msra.mxu0 0
    %464 = vmatprep.subr.bf16.mxu0 0
    %465 = vmatpush1.bf16.msra.mxu0 0
    %466 = vmatprep.subr.bf16.mxu0 0
    %467 = vmatpush1.bf16.msra.mxu0 0
    %468 = vmatprep.subr.bf16.mxu0 0
    %469 = vmatpush1.bf16.msra.mxu0 0
    %470 = vmatprep.subr.bf16.mxu0 0
    %471 = vmatpush1.bf16.msra.mxu0 0
    %472 = vmatprep.mubr.bf16.mxu0 0
    %473 = vmatmul.mubr.bf16.gmra.mrb[0].mxu0 %v438
    %v474 = vpop.f32.mrb[0].mxu0
    %v475 = vadd.f32 0.0, %v474
    %v476 = vpop.f32.mrb[0].mxu0
    %v477 = vpop.f32.mrb[0].mxu0
    %v478 = vpop.f32.mrb[0].mxu0
    %479 = vdwg.mxu0
    %480 = vmatprep.subr.bf16.mxu0 0
    %481 = vmatpush1.bf16.msra.mxu0 %v326
    %482 = vmatprep.subr.bf16.mxu0 0
    %483 = vmatpush1.bf16.msra.mxu0 %v327
    %484 = vmatprep.subr.bf16.mxu0 0
    %485 = vmatpush1.bf16.msra.mxu0 %v328
    %486 = vmatprep.subr.bf16.mxu0 0
    %487 = vmatpush1.bf16.msra.mxu0 %v329
    %488 = vmatprep.subr.bf16.mxu0 0
    %489 = vmatpush1.bf16.msra.mxu0 %v330
    %490 = vmatprep.subr.bf16.mxu0 0
    %491 = vmatpush1.bf16.msra.mxu0 %v331
    %492 = vmatprep.subr.bf16.mxu0 0
    %493 = vmatpush1.bf16.msra.mxu0 0
    %494 = vmatprep.subr.bf16.mxu0 0
    %495 = vmatpush1.bf16.msra.mxu0 0
    %496 = vmatprep.subr.bf16.mxu0 0
    %497 = vmatpush1.bf16.msra.mxu0 0
    %498 = vmatprep.subr.bf16.mxu0 0
    %499 = vmatpush1.bf16.msra.mxu0 0
    %500 = vmatprep.subr.bf16.mxu0 0
    %501 = vmatpush1.bf16.msra.mxu0 0
    %502 = vmatprep.subr.bf16.mxu0 0
    %503 = vmatpush1.bf16.msra.mxu0 0
    %504 = vmatprep.subr.bf16.mxu0 0
    %505 = vmatpush1.bf16.msra.mxu0 0
    %506 = vmatprep.subr.bf16.mxu0 0
    %507 = vmatpush1.bf16.msra.mxu0 0
    %508 = vmatprep.subr.bf16.mxu0 0
    %509 = vmatpush1.bf16.msra.mxu0 0
    %510 = vmatprep.subr.bf16.mxu0 0
    %511 = vmatpush1.bf16.msra.mxu0 0
    %512 = vmatprep.mubr.bf16.mxu0 0
    %513 = vmatmul.mubr.bf16.gmra.mrb[0].mxu0 %v438
    %v514 = vpop.f32.mrb[0].mxu0
    %v515 = vadd.f32 0.0, %v514
    %v516 = vpop.f32.mrb[0].mxu0
    %v517 = vpop.f32.mrb[0].mxu0
    %v518 = vpop.f32.mrb[0].mxu0
    %519 = vdwg.mxu0
    %v520 = vrcp.pop %v515
    %v521 = vmul.f32 %v475, %v520
    %v523 = vrot.slane %v277, 4
    %v524 = vsel %vm292, %v294, %v523
    %v527 = vsel %vm297, %v523, %v276
    %v529 = vmul.bf16 %v524, %v326
    %v530 = vmul.bf16 %v527, %v327
    %v531 = vmul.bf16 %v277, %v328
    %v532 = vmul.bf16 %v524, %v329
    %v533 = vmul.bf16 %v527, %v330
    %v534 = vmul.bf16 %v277, %v331
    %v536 = vrot.slane %v189, 4
    %v538 = vsel %vm49, %v536, 0
    %v541 = vsel %vm49, %v529, 0
    %v544 = vsel %vm49, %v530, 0
    %v547 = vsel %vm49, %v531, 0
    %v550 = vsel %vm49, %v532, 0
    %v553 = vsel %vm49, %v533, 0
    %v556 = vsel %vm49, %v534, 0
    %558 = vmatprep.subr.bf16.mxu0 0
    %559 = vmatpush1.bf16.xpose.msra.mxu0 %v541
    %560 = vmatprep.subr.bf16.mxu0 0
    %561 = vmatpush1.bf16.xpose.msra.mxu0 %v544
    %562 = vmatprep.subr.bf16.mxu0 0
    %563 = vmatpush1.bf16.xpose.msra.mxu0 %v547
    %564 = vmatprep.subr.bf16.mxu0 0
    %565 = vmatpush1.bf16.xpose.msra.mxu0 %v550
    %566 = vmatprep.subr.bf16.mxu0 0
    %567 = vmatpush1.bf16.xpose.msra.mxu0 %v553
    %568 = vmatprep.subr.bf16.mxu0 0
    %569 = vmatpush1.bf16.xpose.msra.mxu0 %v556
    %570 = vmatprep.subr.bf16.mxu0 0
    %571 = vmatpush1.bf16.xpose.msra.mxu0 0
    %572 = vmatprep.subr.bf16.mxu0 0
    %573 = vmatpush1.bf16.xpose.msra.mxu0 0
    %574 = vmatprep.subr.bf16.mxu0 0
    %575 = vmatpush1.bf16.xpose.msra.mxu0 0
    %576 = vmatprep.subr.bf16.mxu0 0
    %577 = vmatpush1.bf16.xpose.msra.mxu0 0
    %578 = vmatprep.subr.bf16.mxu0 0
    %579 = vmatpush1.bf16.xpose.msra.mxu0 0
    %580 = vmatprep.subr.bf16.mxu0 0
    %581 = vmatpush1.bf16.xpose.msra.mxu0 0
    %582 = vmatprep.subr.bf16.mxu0 0
    %583 = vmatpush1.bf16.xpose.msra.mxu0 0
    %584 = vmatprep.subr.bf16.mxu0 0
    %585 = vmatpush1.bf16.xpose.msra.mxu0 0
    %586 = vmatprep.subr.bf16.mxu0 0
    %587 = vmatpush1.bf16.xpose.msra.mxu0 0
    %588 = vmatprep.subr.bf16.mxu0 0
    %589 = vmatpush1.bf16.xpose.msra.mxu0 0
    %590 = vmatprep.mubr.bf16.mxu0 0
    %591 = vmatmul.mubr.bf16.gmra.mrb[0].mxu0 %v538
    %v592 = vpop.f32.mrb[0].mxu0
    %v593 = vadd.f32 0.0, %v592
    %v594 = vpop.f32.mrb[0].mxu0
    %v595 = vpop.f32.mrb[0].mxu0
    %v596 = vpop.f32.mrb[0].mxu0
    %597 = vdwg.mxu0
    %v598 = vsel %vm405, %v593, -inf
    %599 = vmax.xlane.f32.xlu0 %v598
    %v600 = vpop.xlane.xlu0 %599
    %v601 = vsub.f32 %v593, %v600
    %v602 = vmul.f32 %v601, 1.442695
    %v603 = vpow.pop %v602
    %v604 = vpack.c.bf16 %v603, %v603
    %611 = vrot.lane.b32.xlu0 %v529, 96
    %v612 = vpop.permute.xlu0 %611
    %613 = vrot.lane.b32.xlu0 %v530, 96
    %v614 = vpop.permute.xlu0 %613
    %615 = vrot.lane.b32.xlu0 %v531, 96
    %v616 = vpop.permute.xlu0 %615
    %617 = vrot.lane.b32.xlu0 %v532, 96
    %v618 = vpop.permute.xlu0 %617
    %619 = vrot.lane.b32.xlu0 %v533, 96
    %v620 = vpop.permute.xlu0 %619
    %621 = vrot.lane.b32.xlu0 %v534, 96
    %v622 = vpop.permute.xlu0 %621
    %v630 = vsel %vm405, %v604, 0
    %632 = vmatprep.subr.bf16.mxu0 0
    %633 = vmatpush1.bf16.msra.mxu0 %v612
    %634 = vmatprep.subr.bf16.mxu0 0
    %635 = vmatpush1.bf16.msra.mxu0 %v614
    %636 = vmatprep.subr.bf16.mxu0 0
    %637 = vmatpush1.bf16.msra.mxu0 %v616
    %638 = vmatprep.subr.bf16.mxu0 0
    %639 = vmatpush1.bf16.msra.mxu0 %v618
    %640 = vmatprep.subr.bf16.mxu0 0
    %641 = vmatpush1.bf16.msra.mxu0 %v620
    %642 = vmatprep.subr.bf16.mxu0 0
    %643 = vmatpush1.bf16.msra.mxu0 %v622
    %644 = vmatprep.subr.bf16.mxu0 0
    %645 = vmatpush1.bf16.msra.mxu0 0
    %646 = vmatprep.subr.bf16.mxu0 0
    %647 = vmatpush1.bf16.msra.mxu0 0
    %648 = vmatprep.subr.bf16.mxu0 0
    %649 = vmatpush1.bf16.msra.mxu0 0
    %650 = vmatprep.subr.bf16.mxu0 0
    %651 = vmatpush1.bf16.msra.mxu0 0
    %652 = vmatprep.subr.bf16.mxu0 0
    %653 = vmatpush1.bf16.msra.mxu0 0
    %654 = vmatprep.subr.bf16.mxu0 0
    %655 = vmatpush1.bf16.msra.mxu0 0
    %656 = vmatprep.subr.bf16.mxu0 0
    %657 = vmatpush1.bf16.msra.mxu0 0
    %658 = vmatprep.subr.bf16.mxu0 0
    %659 = vmatpush1.bf16.msra.mxu0 0
    %660 = vmatprep.subr.bf16.mxu0 0
    %661 = vmatpush1.bf16.msra.mxu0 0
    %662 = vmatprep.subr.bf16.mxu0 0
    %663 = vmatpush1.bf16.msra.mxu0 0
    %664 = vmatprep.mubr.bf16.mxu0 0
    %665 = vmatmul.mubr.bf16.gmra.mrb[0].mxu0 %v630
    %v666 = vpop.f32.mrb[0].mxu0
    %v667 = vadd.f32 0.0, %v666
    %v668 = vpop.f32.mrb[0].mxu0
    %v669 = vpop.f32.mrb[0].mxu0
    %v670 = vpop.f32.mrb[0].mxu0
    %671 = vdwg.mxu0
    %672 = vmatprep.subr.bf16.mxu0 0
    %673 = vmatpush1.bf16.msra.mxu0 %v326
    %674 = vmatprep.subr.bf16.mxu0 0
    %675 = vmatpush1.bf16.msra.mxu0 %v327
    %676 = vmatprep.subr.bf16.mxu0 0
    %677 = vmatpush1.bf16.msra.mxu0 %v328
    %678 = vmatprep.subr.bf16.mxu0 0
    %679 = vmatpush1.bf16.msra.mxu0 %v329
    %680 = vmatprep.subr.bf16.mxu0 0
    %681 = vmatpush1.bf16.msra.mxu0 %v330
    %682 = vmatprep.subr.bf16.mxu0 0
    %683 = vmatpush1.bf16.msra.mxu0 %v331
    %684 = vmatprep.subr.bf16.mxu0 0
    %685 = vmatpush1.bf16.msra.mxu0 0
    %686 = vmatprep.subr.bf16.mxu0 0
    %687 = vmatpush1.bf16.msra.mxu0 0
    %688 = vmatprep.subr.bf16.mxu0 0
    %689 = vmatpush1.bf16.msra.mxu0 0
    %690 = vmatprep.subr.bf16.mxu0 0
    %691 = vmatpush1.bf16.msra.mxu0 0
    %692 = vmatprep.subr.bf16.mxu0 0
    %693 = vmatpush1.bf16.msra.mxu0 0
    %694 = vmatprep.subr.bf16.mxu0 0
    %695 = vmatpush1.bf16.msra.mxu0 0
    %696 = vmatprep.subr.bf16.mxu0 0
    %697 = vmatpush1.bf16.msra.mxu0 0
    %698 = vmatprep.subr.bf16.mxu0 0
    %699 = vmatpush1.bf16.msra.mxu0 0
    %700 = vmatprep.subr.bf16.mxu0 0
    %701 = vmatpush1.bf16.msra.mxu0 0
    %702 = vmatprep.subr.bf16.mxu0 0
    %703 = vmatpush1.bf16.msra.mxu0 0
    %704 = vmatprep.mubr.bf16.mxu0 0
    %705 = vmatmul.mubr.bf16.gmra.mrb[0].mxu0 %v630
    %v706 = vpop.f32.mrb[0].mxu0
    %v707 = vadd.f32 0.0, %v706
    %v708 = vpop.f32.mrb[0].mxu0
    %v709 = vpop.f32.mrb[0].mxu0
    %v710 = vpop.f32.mrb[0].mxu0
    %711 = vdwg.mxu0
    %v712 = vrcp.pop %v707
    %v713 = vmul.f32 %v667, %v712
    %v714 = vpack.c.bf16 %v713, %v521
    %v715 = vld [vmem:[%s7] sm:$0xf]
    %v716 = vld [vmem:[%s7 + $0x4] sm:$0xf]
    %v717 = vld [vmem:[%s7 + $0x8] sm:$0xf]
    %v718 = vld [vmem:[%s7 + $0xc] sm:$0xf]
    %v723 = vunpack.c.l.b16 %v715
    %v724 = vunpack.c.l.b16 %v716
    %v725 = vunpack.c.l.b16 %v717
    %v726 = vunpack.c.l.b16 %v718
    %v727 = vpack.c.b16 %v724, %v723
    %v728 = vpack.c.b16 %v726, %v725
    %v732 = vsel %vm49, %v714, 0
    %734 = vmatprep.subr.bf16.mxu0 0
    %735 = vmatpush1.bf16.msra.mxu0 %v727
    %736 = vmatprep.subr.bf16.mxu0 0
    %737 = vmatpush1.bf16.msra.mxu0 %v728
    %738 = vmatprep.subr.bf16.mxu0 0
    %739 = vmatpush1.bf16.msra.mxu0 0
    %740 = vmatprep.subr.bf16.mxu0 0
    %741 = vmatpush1.bf16.msra.mxu0 0
    %742 = vmatprep.subr.bf16.mxu0 0
    %743 = vmatpush1.bf16.msra.mxu0 0
    %744 = vmatprep.subr.bf16.mxu0 0
    %745 = vmatpush1.bf16.msra.mxu0 0
    %746 = vmatprep.subr.bf16.mxu0 0
    %747 = vmatpush1.bf16.msra.mxu0 0
    %748 = vmatprep.subr.bf16.mxu0 0
    %749 = vmatpush1.bf16.msra.mxu0 0
    %750 = vmatprep.subr.bf16.mxu0 0
    %751 = vmatpush1.bf16.msra.mxu0 0
    %752 = vmatprep.subr.bf16.mxu0 0
    %753 = vmatpush1.bf16.msra.mxu0 0
    %754 = vmatprep.subr.bf16.mxu0 0
    %755 = vmatpush1.bf16.msra.mxu0 0
    %756 = vmatprep.subr.bf16.mxu0 0
    %757 = vmatpush1.bf16.msra.mxu0 0
    %758 = vmatprep.subr.bf16.mxu0 0
    %759 = vmatpush1.bf16.msra.mxu0 0
    %760 = vmatprep.subr.bf16.mxu0 0
    %761 = vmatpush1.bf16.msra.mxu0 0
    %762 = vmatprep.subr.bf16.mxu0 0
    %763 = vmatpush1.bf16.msra.mxu0 0
    %764 = vmatprep.subr.bf16.mxu0 0
    %765 = vmatpush1.bf16.msra.mxu0 0
    %766 = vmatprep.mubr.bf16.mxu0 0
    %767 = vmatmul.mubr.bf16.gmra.mrb[0].mxu0 %v732
    %v768 = vpop.f32.mrb[0].mxu0
    %v769 = vadd.f32 0.0, %v768
    %v770 = vpop.f32.mrb[0].mxu0
    %v771 = vpop.f32.mrb[0].mxu0
    %v772 = vadd.f32 0.0, %v771
    %v773 = vpop.f32.mrb[0].mxu0
    %774 = vdwg.mxu0
    %v775 = vadd.f32 %v40, %v769
    %v776 = vadd.f32 %v41, %v772
    %v777 = vld [vmem:[%s8] sm:$0x1]
    %v778 = vmul.f32 %v775, %v775
    %v779 = vmul.f32 %v776, %v776
    %v780 = vsel %vm49, %v778, 0.0
    %781 = vadd.xlane.f32.xlu0 %v780
    %v782 = vpop.xlane.xlu0 %781
    %v783 = vsel %vm49, %v779, 0.0
    %784 = vadd.xlane.f32.xlu0 %v783
    %v785 = vpop.xlane.xlu0 %784
    %v786 = vmul.f32 %v782, %v56
    %v787 = vmul.f32 %v785, %v56
    %v788 = vadd.f32 %v786, 1e-06
    %v789 = vadd.f32 %v787, 1e-06
    %v790 = vrsqrt.pop %v788
    %v791 = vrsqrt.pop %v789
    %v792 = vmul.f32 %v775, %v790
    %v793 = vmul.f32 %v776, %v791
    %v795 = vlaneseq
    %v796 = vshrl.u32 %v795, 7
    %v797 = vsub.s32 0, %v796
    %v798 = vrot.slane %v777, %v797
    %v800 = vmul.f32 %v798, %v792
    %v801 = vmul.f32 %v798, %v793
    %v802 = vpack.c.bf16 %v801, %v800
    %v803 = vld [vmem:[%s9] sm:$0xff]
    %v804 = vld [vmem:[%s9 + $0x8] sm:$0xff]
    %v805 = vld [vmem:[%s9 + $0x10] sm:$0xff]
    %v806 = vld [vmem:[%s9 + $0x18] sm:$0xff]
    %v811 = vunpack.c.l.b16 %v803
    %v812 = vunpack.c.h.b16 %v803
    %v813 = vunpack.c.l.b16 %v804
    %v814 = vunpack.c.h.b16 %v804
    %v815 = vunpack.c.l.b16 %v805
    %v816 = vunpack.c.h.b16 %v805
    %v817 = vunpack.c.l.b16 %v806
    %v818 = vunpack.c.h.b16 %v806
    %v819 = vpack.c.b16 %v813, %v811
    %v820 = vpack.c.b16 %v814, %v812
    %v821 = vpack.c.b16 %v817, %v815
    %v822 = vpack.c.b16 %v818, %v816
    %v828 = vsel %vm49, %v802, 0
    %830 = vmatprep.subr.bf16.mxu0 %v820
    %831 = vmatpush1.bf16.msra.mxu0 %v819
    %832 = vmatprep.subr.bf16.mxu0 %v822
    %833 = vmatpush1.bf16.msra.mxu0 %v821
    %834 = vmatprep.subr.bf16.mxu0 0
    %835 = vmatpush1.bf16.msra.mxu0 0
    %836 = vmatprep.subr.bf16.mxu0 0
    %837 = vmatpush1.bf16.msra.mxu0 0
    %838 = vmatprep.subr.bf16.mxu0 0
    %839 = vmatpush1.bf16.msra.mxu0 0
    %840 = vmatprep.subr.bf16.mxu0 0
    %841 = vmatpush1.bf16.msra.mxu0 0
    %842 = vmatprep.subr.bf16.mxu0 0
    %843 = vmatpush1.bf16.msra.mxu0 0
    %844 = vmatprep.subr.bf16.mxu0 0
    %845 = vmatpush1.bf16.msra.mxu0 0
    %846 = vmatprep.subr.bf16.mxu0 0
    %847 = vmatpush1.bf16.msra.mxu0 0
    %848 = vmatprep.subr.bf16.mxu0 0
    %849 = vmatpush1.bf16.msra.mxu0 0
    %850 = vmatprep.subr.bf16.mxu0 0
    %851 = vmatpush1.bf16.msra.mxu0 0
    %852 = vmatprep.subr.bf16.mxu0 0
    %853 = vmatpush1.bf16.msra.mxu0 0
    %854 = vmatprep.subr.bf16.mxu0 0
    %855 = vmatpush1.bf16.msra.mxu0 0
    %856 = vmatprep.subr.bf16.mxu0 0
    %857 = vmatpush1.bf16.msra.mxu0 0
    %858 = vmatprep.subr.bf16.mxu0 0
    %859 = vmatpush1.bf16.msra.mxu0 0
    %860 = vmatprep.subr.bf16.mxu0 0
    %861 = vmatpush1.bf16.msra.mxu0 0
    %862 = vmatprep.mubr.bf16.mxu0 0
    %863 = vmatmul.mubr.bf16.gmra.mrb[0].mxu0 %v828
    %v864 = vpop.f32.mrb[0].mxu0
    %v865 = vadd.f32 0.0, %v864
    %v866 = vpop.f32.mrb[0].mxu0
    %v867 = vadd.f32 0.0, %v866
    %v868 = vpop.f32.mrb[0].mxu0
    %v869 = vadd.f32 0.0, %v868
    %v870 = vpop.f32.mrb[0].mxu0
    %v871 = vadd.f32 0.0, %v870
    %872 = vdwg.mxu0
    %v873 = vxor.u32 %v865, 2147483648
    %v874 = vxor.u32 %v869, 2147483648
    %v875 = vmul.f32 %v873, 1.442695
    %v876 = vpow.pop %v875
    %v877 = vmul.f32 %v874, 1.442695
    %v878 = vpow.pop %v877
    %v879 = vadd.f32 %v876, 1.0
    %v880 = vadd.f32 %v878, 1.0
    %v881 = vrcp.pop %v879
    %v882 = vmul.f32 1.0, %v881
    %v883 = vrcp.pop %v880
    %v884 = vmul.f32 1.0, %v883
    %v885 = vmul.f32 %v865, %v882
    %v886 = vmul.f32 %v869, %v884
    %v887 = vmul.f32 %v885, %v867
    %v888 = vmul.f32 %v886, %v871
    %v889 = vpack.c.bf16 %v888, %v887
    %v890 = vld [vmem:[%s10] sm:$0xf]
    %v891 = vld [vmem:[%s10 + $0x4] sm:$0xf]
    %v892 = vld [vmem:[%s10 + $0x8] sm:$0xf]
    %v893 = vld [vmem:[%s10 + $0xc] sm:$0xf]
    %v894 = vld [vmem:[%s10 + $0x10] sm:$0xf]
    %v895 = vld [vmem:[%s10 + $0x14] sm:$0xf]
    %v896 = vld [vmem:[%s10 + $0x18] sm:$0xf]
    %v897 = vld [vmem:[%s10 + $0x1c] sm:$0xf]
    %v898 = vld [vmem:[%s10 + $0x20] sm:$0xf]
    %v899 = vld [vmem:[%s10 + $0x24] sm:$0xf]
    %v900 = vld [vmem:[%s10 + $0x28] sm:$0xf]
    %v901 = vld [vmem:[%s10 + $0x2c] sm:$0xf]
    %v902 = vld [vmem:[%s10 + $0x30] sm:$0xf]
    %v903 = vld [vmem:[%s10 + $0x34] sm:$0xf]
    %v904 = vld [vmem:[%s10 + $0x38] sm:$0xf]
    %v905 = vld [vmem:[%s10 + $0x3c] sm:$0xf]
    %v922 = vunpack.c.l.b16 %v890
    %v923 = vunpack.c.l.b16 %v891
    %v924 = vunpack.c.l.b16 %v892
    %v925 = vunpack.c.l.b16 %v893
    %v926 = vunpack.c.l.b16 %v894
    %v927 = vunpack.c.l.b16 %v895
    %v928 = vunpack.c.l.b16 %v896
    %v929 = vunpack.c.l.b16 %v897
    %v930 = vunpack.c.l.b16 %v898
    %v931 = vunpack.c.l.b16 %v899
    %v932 = vunpack.c.l.b16 %v900
    %v933 = vunpack.c.l.b16 %v901
    %v934 = vunpack.c.l.b16 %v902
    %v935 = vunpack.c.l.b16 %v903
    %v936 = vunpack.c.l.b16 %v904
    %v937 = vunpack.c.l.b16 %v905
    %v938 = vpack.c.b16 %v923, %v922
    %v939 = vpack.c.b16 %v925, %v924
    %v940 = vpack.c.b16 %v927, %v926
    %v941 = vpack.c.b16 %v929, %v928
    %v942 = vpack.c.b16 %v931, %v930
    %v943 = vpack.c.b16 %v933, %v932
    %v944 = vpack.c.b16 %v935, %v934
    %v945 = vpack.c.b16 %v937, %v936
    %954 = vmatprep.subr.bf16.mxu0 0
    %955 = vmatpush1.bf16.msra.mxu0 %v938
    %956 = vmatprep.subr.bf16.mxu0 0
    %957 = vmatpush1.bf16.msra.mxu0 %v939
    %958 = vmatprep.subr.bf16.mxu0 0
    %959 = vmatpush1.bf16.msra.mxu0 %v940
    %960 = vmatprep.subr.bf16.mxu0 0
    %961 = vmatpush1.bf16.msra.mxu0 %v941
    %962 = vmatprep.subr.bf16.mxu0 0
    %963 = vmatpush1.bf16.msra.mxu0 %v942
    %964 = vmatprep.subr.bf16.mxu0 0
    %965 = vmatpush1.bf16.msra.mxu0 %v943
    %966 = vmatprep.subr.bf16.mxu0 0
    %967 = vmatpush1.bf16.msra.mxu0 %v944
    %968 = vmatprep.subr.bf16.mxu0 0
    %969 = vmatpush1.bf16.msra.mxu0 %v945
    %970 = vmatprep.subr.bf16.mxu0 0
    %971 = vmatpush1.bf16.msra.mxu0 0
    %972 = vmatprep.subr.bf16.mxu0 0
    %973 = vmatpush1.bf16.msra.mxu0 0
    %974 = vmatprep.subr.bf16.mxu0 0
    %975 = vmatpush1.bf16.msra.mxu0 0
    %976 = vmatprep.subr.bf16.mxu0 0
    %977 = vmatpush1.bf16.msra.mxu0 0
    %978 = vmatprep.subr.bf16.mxu0 0
    %979 = vmatpush1.bf16.msra.mxu0 0
    %980 = vmatprep.subr.bf16.mxu0 0
    %981 = vmatpush1.bf16.msra.mxu0 0
    %982 = vmatprep.subr.bf16.mxu0 0
    %983 = vmatpush1.bf16.msra.mxu0 0
    %984 = vmatprep.subr.bf16.mxu0 0
    %985 = vmatpush1.bf16.msra.mxu0 0
    %986 = vmatprep.mubr.bf16.mxu0 0
    %987 = vmatmul.mubr.bf16.gmra.mrb[0].mxu0 %v889
    %v988 = vpop.f32.mrb[0].mxu0
    %v989 = vadd.f32 0.0, %v988
    %v990 = vpop.f32.mrb[0].mxu0
    %v991 = vpop.f32.mrb[0].mxu0
    %v992 = vadd.f32 0.0, %v991
    %v993 = vpop.f32.mrb[0].mxu0
    %994 = vdwg.mxu0
    %v995 = vadd.f32 %v775, %v989
    %v996 = vadd.f32 %v776, %v992
    %997 = vst.msk [vmem:[#allocation3] sm:$0xff] %vm49, %v995
    %998 = vst.msk [vmem:[#allocation3 + $0x8] sm:$0xff] %vm49, %v996
    // Predicated region
    $region46: #{tpu_custom_call.1} parent=1 // pred_check
      _
    $region47: #{tpu_custom_call.1} parent=1 // pred_check_branch
      %1000 = sbr.rel (0) target = $region49
    $region48: #{tpu_custom_call.1} parent=1 // pred_region
      %s1002 = ssub.s32 256, 256
      %1003 = vsyncadd [#allocation4], %s1002
      %s1004 = sshll.u32 [#allocation3], 4
      %s1005 = int_to_ptr.vmem [resolvable:$true] %s1004
      %1010 = dma.vmem_to_hbm [thread:$0]  %s1005, 256, %s11, [#allocation4], 128, 128, 8
    $region49: #{tpu_custom_call.1} parent=1 // pred_fallthru
      _
    // Predicated region
    $region50: #{tpu_custom_call.1} parent=1 // pred_check
      _
    $region51: #{tpu_custom_call.1} parent=1 // pred_check_branch
      %1012 = sbr.rel (0) target = $region53
    $region52: #{tpu_custom_call.1} parent=1 // pred_region
      %1013 = dma.done [#allocation4], 256
    $region53: #{tpu_custom_call.1} parent=1 // pred_fallthru
      _
    %1014 = vsyncpa [#allocation4], 1

</llo_original>
